<compile_context>
chip_gen: v7x
topology: tpu7x:2x2x1
jax: 0.10.0
libtpu: 0.0.40
codegen_flags: <defaults>
</compile_context>

<pallas_src>
import jax
import jax.numpy as jnp
from jax.experimental import pallas as pl
from jax.experimental.pallas import tpu as pltpu

LANE = 128
SUBLANE = 8


def _round_up(x, m):
    return (x + m - 1) // m * m


# ----------------------------- Pallas kernel ------------------------------ #
def _make_kernel(part_dims, w1_offsets):
    n_parts = len(part_dims)

    def kernel(*refs):
        part_refs = refs[:n_parts]
        w1_ref, wstk_ref, b_ref, o_ref = refs[n_parts:n_parts + 4]
        tb = o_ref.shape[0]
        hp = b_ref.shape[1]

        # Fused torch.cat + layer_2_adjust_num:
        #   x0 = cat(parts, dim=1) @ W1 + b1  ==  sum_i parts_i @ W1[rows_i, :] + b1
        x0 = jnp.broadcast_to(b_ref[0:1, :], (tb, hp))
        for i, (d, off) in enumerate(zip(part_dims, w1_offsets)):
            xp = part_refs[i][...]
            if xp.shape[0] != tb:  # stream_size (1, n_ss): broadcast over the batch tile
                xp = jnp.broadcast_to(xp, (tb, d))
            x0 = x0 + jnp.dot(xp, w1_ref[off:off + d, :],
                              preferred_element_type=jnp.float32)

        # hidden1 + ReLU
        a1 = jnp.maximum(
            jnp.dot(x0, wstk_ref[0], preferred_element_type=jnp.float32)
            + b_ref[1:2, :], 0.0)
        # hidden2 + residual + ReLU
        a2 = jnp.maximum(
            jnp.dot(a1, wstk_ref[1], preferred_element_type=jnp.float32)
            + b_ref[2:3, :] + x0, 0.0)
        # out_layer (zero-padded to 128 lanes; column 0 is the real scalar output)
        out = jnp.dot(a2, wstk_ref[2], preferred_element_type=jnp.float32) + b_ref[3:4, :]
        o_ref[...] = out.astype(o_ref.dtype)

    return kernel


def fun_out_mlp_pallas(parts, batched, prepped, part_dims, offsets, batch,
                       batch_tile=512):
    """parts: list of (rows, d_i) f32 arrays in concat order; prepped: packed weights."""
    w1p, wstack, bstack = prepped["w1"], prepped["wstack"], prepped["bstack"]
    hp = wstack.shape[-1]

    if batch <= batch_tile:
        TB, Bp = batch, batch                 # single tile == full dims
    else:
        TB = batch_tile                       # multiple of 8
        Bp = _round_up(batch, TB)
    grid = (Bp // TB,)

    in_specs, args = [], []
    for arr, is_b in zip(parts, batched):
        if is_b:
            if Bp != batch:
                arr = jnp.pad(arr, ((0, Bp - batch), (0, 0)))
            in_specs.append(pl.BlockSpec((TB, arr.shape[1]), lambda i: (i, 0)))
        else:  # stream_size: shared across batch tiles
            in_specs.append(pl.BlockSpec(arr.shape, lambda i: (0, 0)))
        args.append(arr)

    # Weights stay VMEM-resident across all grid steps.
    in_specs += [
        pl.BlockSpec(w1p.shape, lambda i: (0, 0)),
        pl.BlockSpec(wstack.shape, lambda i: (0, 0, 0)),
        pl.BlockSpec(bstack.shape, lambda i: (0, 0)),
    ]
    args += [w1p, wstack, bstack]

    out = pl.pallas_call(
        _make_kernel(part_dims, offsets),
        out_shape=jax.ShapeDtypeStruct((Bp, hp), jnp.float32),
        grid=grid,
        in_specs=in_specs,
        out_specs=pl.BlockSpec((TB, hp), lambda i: (i, 0)),
        compiler_params=pltpu.CompilerParams(
            dimension_semantics=("parallel",)),   # v7x: shard batch tiles over 2 TCs
    )(*args)
    return out[:batch, :1]


# ------------------------------ module glue -------------------------------- #
def make_params(key, input_dim, hidden):
    """nn.Linear-style U(-1/sqrt(fan_in), 1/sqrt(fan_in)) init; weights stored (in, out)."""
    def linear(k, fan_in, fan_out):
        kw, kb = jax.random.split(k)
        bound = 1.0 / jnp.sqrt(fan_in)
        w = jax.random.uniform(kw, (fan_in, fan_out), jnp.float32, -bound, bound)
        b = jax.random.uniform(kb, (1, fan_out), jnp.float32, -bound, bound)
        return w, b

    k1, k2, k3, k4 = jax.random.split(key, 4)
    w1, b1 = linear(k1, input_dim, hidden)   # layer_2_adjust_num
    w2, b2 = linear(k2, hidden, hidden)      # hidden1
    w3, b3 = linear(k3, hidden, hidden)      # hidden2
    w4, b4 = linear(k4, hidden, 1)           # out_layer[0]
    return dict(w1=w1, b1=b1, w2=w2, b2=b2, w3=w3, b3=b3, w4=w4, b4=b4)


def prep_for_kernel(params, part_dims, hidden):
    """One-time 'module init' packing: padded/stacked weight operands for the kernel."""
    hp = _round_up(hidden, LANE)

    # 8-aligned row offsets for each concat part inside the packed W1.
    offsets, off = [], 0
    for d in part_dims:
        offsets.append(off)
        off = _round_up(off + d, SUBLANE)
    k_packed = max(off, SUBLANE)

    w1p = jnp.zeros((k_packed, hp), jnp.float32)
    col = 0
    for o, d in zip(offsets, part_dims):
        w1p = w1p.at[o:o + d, :hidden].set(params["w1"][col:col + d, :])
        col += d

    def pad_sq(w):
        return jnp.zeros((hp, hp), jnp.float32).at[:w.shape[0], :w.shape[1]].set(w)

    wstack = jnp.stack([pad_sq(params["w2"]), pad_sq(params["w3"]), pad_sq(params["w4"])])

    def pad_b(b):
        return jnp.zeros((1, hp), jnp.float32).at[:, :b.shape[1]].set(b)

    bstack = jnp.concatenate(
        [pad_b(params["b1"]), pad_b(params["b2"]), pad_b(params["b3"]), pad_b(params["b4"])],
        axis=0)

    return dict(w1=w1p, wstack=wstack, bstack=bstack), tuple(offsets)


def fun_out_mlp_forward(prepped, offsets, part_dims, q, read_info_tuple,
                        stream_size, stream_size_input_num):
    parts, batched = [], []
    if stream_size_input_num > 0:
        ss = jnp.broadcast_to(jnp.asarray(stream_size, jnp.float32),
                              (1, stream_size_input_num))
        parts.append(ss)
        batched.append(False)
    parts.append(q.astype(jnp.float32))
    batched.append(True)
    for r in read_info_tuple:
        parts.append(jnp.asarray(r, jnp.float32))
        batched.append(True)

    assert tuple(a.shape[1] for a in parts) == tuple(part_dims)
    return fun_out_mlp_pallas(parts, batched, prepped, part_dims, offsets,
                              batch=q.shape[0])


def reference_forward(params, q, read_info_tuple, stream_size, stream_size_input_num):
    B = q.shape[0]
    if stream_size_input_num == 0:
        x = jnp.concatenate((q,) + tuple(read_info_tuple), axis=1)
    else:
        ss = jnp.broadcast_to(stream_size, (B, stream_size_input_num))
        x = jnp.concatenate((ss, q) + tuple(read_info_tuple), axis=1)
    x0 = x @ params["w1"] + params["b1"]
    a1 = jnp.maximum(x0 @ params["w2"] + params["b2"], 0.0)
    a2 = jnp.maximum(a1 @ params["w3"] + params["b3"] + x0, 0.0)
    return a2 @ params["w4"] + params["b4"]


# --------------------------------- main ------------------------------------ #
if __name__ == "__main__":
    # Config consistent with the module's __init__:
    z_dim = 8
    matrix_depth = 3
    stream_size_input_num = 2
    hidden_layer_size = 32
    B = 8

    input_dim = (z_dim * matrix_depth + z_dim
                 + stream_size_input_num + matrix_depth * 3)   # 24 + 8 + 2 + 9 = 43

    key = jax.random.PRNGKey(0)
    kp, kq, kr1, kr2, ks = jax.random.split(key, 5)

    params = make_params(kp, input_dim, hidden_layer_size)

    q = jax.random.normal(kq, (B, z_dim), jnp.float32)
    read_info_tuple = (
        jax.random.normal(kr1, (B, z_dim * matrix_depth), jnp.float32),
        jax.random.normal(kr2, (B, matrix_depth * 3), jnp.float32),
    )
    stream_size = jax.random.normal(ks, (1, stream_size_input_num), jnp.float32)

    # Concat order of the original module: (stream_size, q, *read_info_tuple)
    part_dims = (stream_size_input_num, z_dim, z_dim * matrix_depth, matrix_depth * 3)
    prepped, offsets = prep_for_kernel(params, part_dims, hidden_layer_size)

    out = fun_out_mlp_forward(prepped, offsets, part_dims, q, read_info_tuple,
                              stream_size, stream_size_input_num)
    out = jax.block_until_ready(out)

    ref = reference_forward(params, q, read_info_tuple, stream_size,
                            stream_size_input_num)
    assert out.shape == (B, 1)
    assert jnp.allclose(out, ref, atol=1e-4, rtol=1e-4), "mismatch vs reference"

    print("KERNEL_OK")
</pallas_src>

<mosaic_0001>
module attributes {stable_mosaic.version = 11 : i64} {
  func.func @kernel(%arg0: i32, %arg1: memref<1x2xf32, #tpu.memory_space<vmem>>, %arg2: memref<8x8xf32, #tpu.memory_space<vmem>>, %arg3: memref<8x24xf32, #tpu.memory_space<vmem>>, %arg4: memref<8x9xf32, #tpu.memory_space<vmem>>, %arg5: memref<56x128xf32, #tpu.memory_space<vmem>>, %arg6: memref<3x128x128xf32, #tpu.memory_space<vmem>>, %arg7: memref<4x128xf32, #tpu.memory_space<vmem>>, %arg8: memref<8x128xf32, #tpu.memory_space<vmem>>) attributes {dimension_semantics = [#tpu.dimension_semantics<parallel>], iteration_bounds = array<i64: 1>, scalar_prefetch = 0 : i64, scratch_operands = 0 : i64, tpu.core_type = #tpu.core_type<tc>, window_params = [{pipeline_mode = #tpu.pipeline_mode<synchronous>, transform_indices = @transform_0, window_bounds = array<i64: 1, 2>}, {transform_indices = @transform_1, window_bounds = array<i64: 8, 8>}, {transform_indices = @transform_2, window_bounds = array<i64: 8, 24>}, {transform_indices = @transform_3, window_bounds = array<i64: 8, 9>}, {pipeline_mode = #tpu.pipeline_mode<synchronous>, transform_indices = @transform_4, window_bounds = array<i64: 56, 128>}, {pipeline_mode = #tpu.pipeline_mode<synchronous>, transform_indices = @transform_5, window_bounds = array<i64: 3, 128, 128>}, {pipeline_mode = #tpu.pipeline_mode<synchronous>, transform_indices = @transform_6, window_bounds = array<i64: 4, 128>}, {transform_indices = @transform_7, window_bounds = array<i64: 8, 128>}]} {
    %c0 = arith.constant 0 : index
    %c0_0 = arith.constant 0 : index
    %0 = vector.load %arg7[%c0, %c0_0] : memref<4x128xf32, #tpu.memory_space<vmem>>, vector<1x128xf32>
    %1 = vector.shape_cast %0 : vector<1x128xf32> to vector<1x128xf32>
    %2 = vector.broadcast %1 : vector<1x128xf32> to vector<8x128xf32>
    %c0_1 = arith.constant 0 : index
    %c0_2 = arith.constant 0 : index
    %3 = vector.load %arg1[%c0_1, %c0_2] : memref<1x2xf32, #tpu.memory_space<vmem>>, vector<1x2xf32>
    %4 = vector.shape_cast %3 : vector<1x2xf32> to vector<1x2xf32>
    %5 = vector.broadcast %4 : vector<1x2xf32> to vector<8x2xf32>
    %c0_3 = arith.constant 0 : index
    %c0_4 = arith.constant 0 : index
    %6 = vector.load %arg5[%c0_3, %c0_4] : memref<56x128xf32, #tpu.memory_space<vmem>>, vector<2x128xf32>
    %cst = arith.constant dense<0.000000e+00> : vector<8x128xf32>
    %7 = tpu.matmul %5, %6, %cst {dimension_numbers = #tpu.dot_dimension_numbers<[1], [0], [0], [1], [0, 0, 1, 1], [], []>} : vector<8x2xf32>, vector<2x128xf32>, vector<8x128xf32> -> vector<8x128xf32>
    %8 = arith.addf %2, %7 : vector<8x128xf32>
    %c0_5 = arith.constant 0 : index
    %c0_6 = arith.constant 0 : index
    %9 = vector.load %arg2[%c0_5, %c0_6] : memref<8x8xf32, #tpu.memory_space<vmem>>, vector<8x8xf32>
    %c8 = arith.constant 8 : index
    %c0_7 = arith.constant 0 : index
    %10 = vector.load %arg5[%c8, %c0_7] : memref<56x128xf32, #tpu.memory_space<vmem>>, vector<8x128xf32>
    %cst_8 = arith.constant dense<0.000000e+00> : vector<8x128xf32>
    %11 = tpu.matmul %9, %10, %cst_8 {dimension_numbers = #tpu.dot_dimension_numbers<[1], [0], [0], [1], [0, 0, 1, 1], [], []>} : vector<8x8xf32>, vector<8x128xf32>, vector<8x128xf32> -> vector<8x128xf32>
    %12 = arith.addf %8, %11 : vector<8x128xf32>
    %c0_9 = arith.constant 0 : index
    %c0_10 = arith.constant 0 : index
    %13 = vector.load %arg3[%c0_9, %c0_10] : memref<8x24xf32, #tpu.memory_space<vmem>>, vector<8x24xf32>
    %c16 = arith.constant 16 : index
    %c0_11 = arith.constant 0 : index
    %14 = vector.load %arg5[%c16, %c0_11] : memref<56x128xf32, #tpu.memory_space<vmem>>, vector<24x128xf32>
    %cst_12 = arith.constant dense<0.000000e+00> : vector<8x128xf32>
    %15 = tpu.matmul %13, %14, %cst_12 {dimension_numbers = #tpu.dot_dimension_numbers<[1], [0], [0], [1], [0, 0, 1, 1], [], []>} : vector<8x24xf32>, vector<24x128xf32>, vector<8x128xf32> -> vector<8x128xf32>
    %16 = arith.addf %12, %15 : vector<8x128xf32>
    %c0_13 = arith.constant 0 : index
    %c0_14 = arith.constant 0 : index
    %17 = vector.load %arg4[%c0_13, %c0_14] : memref<8x9xf32, #tpu.memory_space<vmem>>, vector<8x9xf32>
    %c40 = arith.constant 40 : index
    %c0_15 = arith.constant 0 : index
    %18 = vector.load %arg5[%c40, %c0_15] : memref<56x128xf32, #tpu.memory_space<vmem>>, vector<9x128xf32>
    %cst_16 = arith.constant dense<0.000000e+00> : vector<8x128xf32>
    %19 = tpu.matmul %17, %18, %cst_16 {dimension_numbers = #tpu.dot_dimension_numbers<[1], [0], [0], [1], [0, 0, 1, 1], [], []>} : vector<8x9xf32>, vector<9x128xf32>, vector<8x128xf32> -> vector<8x128xf32>
    %20 = arith.addf %16, %19 : vector<8x128xf32>
    %c0_17 = arith.constant 0 : index
    %c0_18 = arith.constant 0 : index
    %c0_19 = arith.constant 0 : index
    %21 = vector.load %arg6[%c0_17, %c0_18, %c0_19] : memref<3x128x128xf32, #tpu.memory_space<vmem>>, vector<1x128x128xf32>
    %22 = vector.shape_cast %21 : vector<1x128x128xf32> to vector<128x128xf32>
    %cst_20 = arith.constant dense<0.000000e+00> : vector<8x128xf32>
    %23 = tpu.matmul %20, %22, %cst_20 {dimension_numbers = #tpu.dot_dimension_numbers<[1], [0], [0], [1], [0, 0, 1, 1], [], []>} : vector<8x128xf32>, vector<128x128xf32>, vector<8x128xf32> -> vector<8x128xf32>
    %c1 = arith.constant 1 : index
    %c0_21 = arith.constant 0 : index
    %24 = vector.load %arg7[%c1, %c0_21] : memref<4x128xf32, #tpu.memory_space<vmem>>, vector<1x128xf32>
    %25 = vector.broadcast %24 : vector<1x128xf32> to vector<8x128xf32>
    %26 = arith.addf %23, %25 : vector<8x128xf32>
    %cst_22 = arith.constant 0.000000e+00 : f32
    %27 = vector.broadcast %cst_22 : f32 to vector<8x128xf32>
    %28 = arith.maximumf %26, %27 : vector<8x128xf32>
    %c1_23 = arith.constant 1 : index
    %c0_24 = arith.constant 0 : index
    %c0_25 = arith.constant 0 : index
    %29 = vector.load %arg6[%c1_23, %c0_24, %c0_25] : memref<3x128x128xf32, #tpu.memory_space<vmem>>, vector<1x128x128xf32>
    %30 = vector.shape_cast %29 : vector<1x128x128xf32> to vector<128x128xf32>
    %cst_26 = arith.constant dense<0.000000e+00> : vector<8x128xf32>
    %31 = tpu.matmul %28, %30, %cst_26 {dimension_numbers = #tpu.dot_dimension_numbers<[1], [0], [0], [1], [0, 0, 1, 1], [], []>} : vector<8x128xf32>, vector<128x128xf32>, vector<8x128xf32> -> vector<8x128xf32>
    %c2 = arith.constant 2 : index
    %c0_27 = arith.constant 0 : index
    %32 = vector.load %arg7[%c2, %c0_27] : memref<4x128xf32, #tpu.memory_space<vmem>>, vector<1x128xf32>
    %33 = vector.broadcast %32 : vector<1x128xf32> to vector<8x128xf32>
    %34 = arith.addf %31, %33 : vector<8x128xf32>
    %35 = arith.addf %34, %20 : vector<8x128xf32>
    %cst_28 = arith.constant 0.000000e+00 : f32
    %36 = vector.broadcast %cst_28 : f32 to vector<8x128xf32>
    %37 = arith.maximumf %35, %36 : vector<8x128xf32>
    %c2_29 = arith.constant 2 : index
    %c0_30 = arith.constant 0 : index
    %c0_31 = arith.constant 0 : index
    %38 = vector.load %arg6[%c2_29, %c0_30, %c0_31] : memref<3x128x128xf32, #tpu.memory_space<vmem>>, vector<1x128x128xf32>
    %39 = vector.shape_cast %38 : vector<1x128x128xf32> to vector<128x128xf32>
    %cst_32 = arith.constant dense<0.000000e+00> : vector<8x128xf32>
    %40 = tpu.matmul %37, %39, %cst_32 {dimension_numbers = #tpu.dot_dimension_numbers<[1], [0], [0], [1], [0, 0, 1, 1], [], []>} : vector<8x128xf32>, vector<128x128xf32>, vector<8x128xf32> -> vector<8x128xf32>
    %c3 = arith.constant 3 : index
    %c0_33 = arith.constant 0 : index
    %41 = vector.load %arg7[%c3, %c0_33] : memref<4x128xf32, #tpu.memory_space<vmem>>, vector<1x128xf32>
    %42 = vector.broadcast %41 : vector<1x128xf32> to vector<8x128xf32>
    %43 = arith.addf %40, %42 : vector<8x128xf32>
    %c0_34 = arith.constant 0 : index
    %c0_35 = arith.constant 0 : index
    %44 = vector.load %arg8[%c0_34, %c0_35] : memref<8x128xf32, #tpu.memory_space<vmem>>, vector<8x128xf32>
    tpu.vector_store %arg8[%c0_34, %c0_35], %43 {strides = array<i32>} : memref<8x128xf32, #tpu.memory_space<vmem>>, vector<8x128xf32>,
    return
  }
  func.func @transform_0(%arg0: i32) -> (i32, i32) {
    %c0_i32 = arith.constant 0 : i32
    %c0_i32_0 = arith.constant 0 : i32
    %c0_i32_1 = arith.constant 0 : i32
    return %c0_i32, %c0_i32_0 : i32, i32
  }
  func.func @transform_1(%arg0: i32) -> (i32, i32) {
    %c0_i32 = arith.constant 0 : i32
    %c0_i32_0 = arith.constant 0 : i32
    return %arg0, %c0_i32 : i32, i32
  }
  func.func @transform_2(%arg0: i32) -> (i32, i32) {
    %c0_i32 = arith.constant 0 : i32
    %c0_i32_0 = arith.constant 0 : i32
    return %arg0, %c0_i32 : i32, i32
  }
  func.func @transform_3(%arg0: i32) -> (i32, i32) {
    %c0_i32 = arith.constant 0 : i32
    %c0_i32_0 = arith.constant 0 : i32
    return %arg0, %c0_i32 : i32, i32
  }
  func.func @transform_4(%arg0: i32) -> (i32, i32) {
    %c0_i32 = arith.constant 0 : i32
    %c0_i32_0 = arith.constant 0 : i32
    %c0_i32_1 = arith.constant 0 : i32
    return %c0_i32, %c0_i32_0 : i32, i32
  }
  func.func @transform_5(%arg0: i32) -> (i32, i32, i32) {
    %c0_i32 = arith.constant 0 : i32
    %c0_i32_0 = arith.constant 0 : i32
    %c0_i32_1 = arith.constant 0 : i32
    %c0_i32_2 = arith.constant 0 : i32
    return %c0_i32, %c0_i32_0, %c0_i32_1 : i32, i32, i32
  }
  func.func @transform_6(%arg0: i32) -> (i32, i32) {
    %c0_i32 = arith.constant 0 : i32
    %c0_i32_0 = arith.constant 0 : i32
    %c0_i32_1 = arith.constant 0 : i32
    return %c0_i32, %c0_i32_0 : i32, i32
  }
  func.func @transform_7(%arg0: i32) -> (i32, i32) {
    %c0_i32 = arith.constant 0 : i32
    %c0_i32_0 = arith.constant 0 : i32
    return %arg0, %c0_i32 : i32, i32
  }
}

</mosaic_0001>

<llo_original>
// kernel: tpu_custom_call.1
$region0: #{tpu_custom_call.1}
  #allocation0 [shape = 'u32[]', space=smem, size = 0x4, offset = 0x4, fixed_abs, tag = 'smem constant byte address 0x4 - core index']
  #allocation1 [shape = 'u32[144,128]{1,0:T(1,128)}', space=vmem, size = 0x12000, scoped, tag = 'internal scratch']
  %s0 = inlined_call_operand.hbm [shape: f32[1,2], index: 0, kind: input, shape index: {}]
  %s1 = inlined_call_operand.hbm [shape: f32[8,8], index: 1, kind: input, shape index: {}]
  %s2 = inlined_call_operand.hbm [shape: f32[8,24], index: 2, kind: input, shape index: {}]
  %s3 = inlined_call_operand.vmem [shape: f32[8,9], index: 3, kind: input, shape index: {}]
  %s4 = inlined_call_operand.hbm [shape: f32[56,128], index: 4, kind: input, shape index: {}]
  %s5 = inlined_call_operand.hbm [shape: f32[3,128,128], index: 5, kind: input, shape index: {}]
  %s6 = inlined_call_operand.vmem [shape: f32[4,128], index: 6, kind: input, shape index: {}]
  %s7 = inlined_call_operand.hbm [shape: f32[8,128], index: 7, kind: output, shape index: {}]
  %s8 = sld [smem:[#allocation0]]
  $region58: #{tpu_custom_call.1} parent=0
    _
  %s10 = ssub.s32 1, %s8
  %s11 = scalar_select 0, %s10, %s8
  $region1: #{tpu_custom_call.1} parent=0
    #allocation2 [shape = 'u8[512]{0}', space=vmem, size = 0x400, scoped, tag = 'input window, operand 0, single buffered']
    #allocation3 [shape = 's32[1]{0}', space=sflag, size = 0x4, scoped, tag = 'scoped memory for tpu_custom_call.1']
    #allocation4 [shape = 's32[1]{0}', space=sflag, size = 0x4, scoped, tag = 'scoped memory for tpu_custom_call.1']
    #allocation5 [shape = 'u8[4096]{0}', space=vmem, size = 0x1000, scoped, tag = 'input window, operand 1, single buffered']
    #allocation6 [shape = 's32[1]{0}', space=sflag, size = 0x4, scoped, tag = 'scoped memory for tpu_custom_call.1']
    #allocation7 [shape = 'u8[4096]{0}', space=vmem, size = 0x1000, scoped, tag = 'input window, operand 2, single buffered']
    #allocation8 [shape = 'u8[28672]{0}', space=vmem, size = 0x7000, scoped, tag = 'input window, operand 4, single buffered']
    #allocation9 [shape = 's32[1]{0}', space=sflag, size = 0x4, scoped, tag = 'scoped memory for tpu_custom_call.1']
    #allocation10 [shape = 'u8[196608]{0}', space=vmem, size = 0x30000, scoped, tag = 'input window, operand 5, single buffered']
    #allocation11 [shape = 'u8[4096]{0}', space=vmem, size = 0x1000, scoped, tag = 'output window, operand 0, single buffered']
    %12 = vsyncpa [#allocation3], 0
    %13 = vsyncpa [#allocation6], 0
    %14 = vsyncpa [#allocation9], 0
    %15 = vsyncpa [#allocation4], 0
    // Predicated region
    $region2: #{tpu_custom_call.1} parent=1 // pred_check
      _
    $region3: #{tpu_custom_call.1} parent=1 // pred_check_branch
      %17 = sbr.rel (0) target = $region5
    $region4: #{tpu_custom_call.1} parent=1 // pred_region
      %s19 = ssub.s32 16, 16
      %20 = vsyncadd [#allocation3], %s19
      %s22 = sshll.u32 [#allocation2], 4
      %s23 = int_to_ptr.vmem [resolvable:$true] %s22
      %25 = dma.hbm_to_vmem [thread:$0]  %s0, 16, %s23, [#allocation3]
    $region5: #{tpu_custom_call.1} parent=1 // pred_fallthru
      _
    // Predicated region
    $region6: #{tpu_custom_call.1} parent=1 // pred_check
      _
    $region7: #{tpu_custom_call.1} parent=1 // pred_check_branch
      %27 = sbr.rel (0) target = $region9
    $region8: #{tpu_custom_call.1} parent=1 // pred_region
      %s29 = ssub.s32 128, 128
      %30 = vsyncadd [#allocation6], %s29
      %s32 = sshll.u32 [#allocation5], 4
      %s33 = int_to_ptr.vmem [resolvable:$true] %s32
      %35 = dma.hbm_to_vmem [thread:$0]  %s1, 128, %s33, [#allocation6]
    $region9: #{tpu_custom_call.1} parent=1 // pred_fallthru
      _
    // Predicated region
    $region10: #{tpu_custom_call.1} parent=1 // pred_check
      _
    $region11: #{tpu_custom_call.1} parent=1 // pred_check_branch
      %37 = sbr.rel (0) target = $region13
    $region12: #{tpu_custom_call.1} parent=1 // pred_region
      %s39 = ssub.s32 128, 128
      %40 = vsyncadd [#allocation6], %s39
      %s42 = sshll.u32 [#allocation7], 4
      %s43 = int_to_ptr.vmem [resolvable:$true] %s42
      %45 = dma.hbm_to_vmem [thread:$0]  %s2, 128, %s43, [#allocation6]
    $region13: #{tpu_custom_call.1} parent=1 // pred_fallthru
      _
    // Predicated region
    $region14: #{tpu_custom_call.1} parent=1 // pred_check
      _
    $region15: #{tpu_custom_call.1} parent=1 // pred_check_branch
      %47 = sbr.rel (0) target = $region17
    $region16: #{tpu_custom_call.1} parent=1 // pred_region
      _
    $region17: #{tpu_custom_call.1} parent=1 // pred_fallthru
      _
    // Predicated region
    $region18: #{tpu_custom_call.1} parent=1 // pred_check
      _
    $region19: #{tpu_custom_call.1} parent=1 // pred_check_branch
      %49 = sbr.rel (0) target = $region21
    $region20: #{tpu_custom_call.1} parent=1 // pred_region
      %s51 = ssub.s32 896, 896
      %52 = vsyncadd [#allocation9], %s51
      %s53 = sshll.u32 [#allocation8], 4
      %s54 = int_to_ptr.vmem [resolvable:$true] %s53
      %59 = dma.hbm_to_vmem [thread:$0]  %s4, 896, %s54, [#allocation9], 128, 128, 8
    $region21: #{tpu_custom_call.1} parent=1 // pred_fallthru
      _
    // Predicated region
    $region22: #{tpu_custom_call.1} parent=1 // pred_check
      _
    $region23: #{tpu_custom_call.1} parent=1 // pred_check_branch
      %61 = sbr.rel (0) target = $region25
    $region24: #{tpu_custom_call.1} parent=1 // pred_region
      %s63 = ssub.s32 6144, 6144
      %64 = vsyncadd [#allocation9], %s63
      %s65 = sshll.u32 [#allocation10], 4
      %s66 = int_to_ptr.vmem [resolvable:$true] %s65
      %71 = dma.hbm_to_vmem [thread:$0]  %s5, 6144, %s66, [#allocation9], 128, 128, 8
    $region25: #{tpu_custom_call.1} parent=1 // pred_fallthru
      _
    // Predicated region
    $region26: #{tpu_custom_call.1} parent=1 // pred_check
      _
    $region27: #{tpu_custom_call.1} parent=1 // pred_check_branch
      %73 = sbr.rel (0) target = $region29
    $region28: #{tpu_custom_call.1} parent=1 // pred_region
      _
    $region29: #{tpu_custom_call.1} parent=1 // pred_fallthru
      _
    // Predicated region
    $region30: #{tpu_custom_call.1} parent=1 // pred_check
      _
    $region31: #{tpu_custom_call.1} parent=1 // pred_check_branch
      %75 = sbr.rel (0) target = $region33
    $region32: #{tpu_custom_call.1} parent=1 // pred_region
      %76 = dma.done [#allocation3], 16
    $region33: #{tpu_custom_call.1} parent=1 // pred_fallthru
      _
    // Predicated region
    $region34: #{tpu_custom_call.1} parent=1 // pred_check
      _
    $region35: #{tpu_custom_call.1} parent=1 // pred_check_branch
      %78 = sbr.rel (0) target = $region37
    $region36: #{tpu_custom_call.1} parent=1 // pred_region
      %79 = dma.done [#allocation6], 128
    $region37: #{tpu_custom_call.1} parent=1 // pred_fallthru
      _
    // Predicated region
    $region38: #{tpu_custom_call.1} parent=1 // pred_check
      _
    $region39: #{tpu_custom_call.1} parent=1 // pred_check_branch
      %81 = sbr.rel (0) target = $region41
    $region40: #{tpu_custom_call.1} parent=1 // pred_region
      %82 = dma.done [#allocation6], 128
    $region41: #{tpu_custom_call.1} parent=1 // pred_fallthru
      _
    // Predicated region
    $region42: #{tpu_custom_call.1} parent=1 // pred_check
      _
    $region43: #{tpu_custom_call.1} parent=1 // pred_check_branch
      %84 = sbr.rel (0) target = $region45
    $region44: #{tpu_custom_call.1} parent=1 // pred_region
      %85 = dma.done [#allocation9], 896
    $region45: #{tpu_custom_call.1} parent=1 // pred_fallthru
      _
    // Predicated region
    $region46: #{tpu_custom_call.1} parent=1 // pred_check
      _
    $region47: #{tpu_custom_call.1} parent=1 // pred_check_branch
      %87 = sbr.rel (0) target = $region49
    $region48: #{tpu_custom_call.1} parent=1 // pred_region
      %88 = dma.done [#allocation9], 6144
    $region49: #{tpu_custom_call.1} parent=1 // pred_fallthru
      _
    %v89 = vld [vmem:[%s6] sm:$0x1]
    %v90 = vlaneseq
    %v91 = vshrl.u32 %v90, 7
    %v92 = vsub.s32 0, %v91
    %v93 = vrot.slane %v89, %v92
    %v94 = vld [vmem:[#allocation2] sm:$0x1]
    %v96 = vlaneseq
    %v97 = vshrl.u32 %v96, 7
    %v98 = vsub.s32 0, %v97
    %v99 = vrot.slane %v94, %v98
    %v100 = vld [vmem:[#allocation8] sm:$0x3]
    %vm101 = vcmask 15360
    %v102 = vsel %vm101, %v99, 0
    %vm104 = vcmask 1041408
    %v106 = vsel %vm104, %v100, 0
    %108 = vmatprep.subr.mxu0 0.0
    %109 = vmatpush1.msra.mxu0 %v106
    %110 = vmatprep.subr.mxu0 0.0
    %111 = vmatpush1.msra.mxu0 0.0
    %112 = vmatprep.subr.mxu0 0.0
    %113 = vmatpush1.msra.mxu0 0.0
    %114 = vmatprep.subr.mxu0 0.0
    %115 = vmatpush1.msra.mxu0 0.0
    %116 = vmatprep.subr.mxu0 0.0
    %117 = vmatpush1.msra.mxu0 0.0
    %118 = vmatprep.subr.mxu0 0.0
    %119 = vmatpush1.msra.mxu0 0.0
    %120 = vmatprep.subr.mxu0 0.0
    %121 = vmatpush1.msra.mxu0 0.0
    %122 = vmatprep.subr.mxu0 0.0
    %123 = vmatpush1.msra.mxu0 0.0
    %124 = vmatprep.subr.mxu0 0.0
    %125 = vmatpush1.msra.mxu0 0.0
    %126 = vmatprep.subr.mxu0 0.0
    %127 = vmatpush1.msra.mxu0 0.0
    %128 = vmatprep.subr.mxu0 0.0
    %129 = vmatpush1.msra.mxu0 0.0
    %130 = vmatprep.subr.mxu0 0.0
    %131 = vmatpush1.msra.mxu0 0.0
    %132 = vmatprep.subr.mxu0 0.0
    %133 = vmatpush1.msra.mxu0 0.0
    %134 = vmatprep.subr.mxu0 0.0
    %135 = vmatpush1.msra.mxu0 0.0
    %136 = vmatprep.subr.mxu0 0.0
    %137 = vmatpush1.msra.mxu0 0.0
    %138 = vmatprep.subr.mxu0 0.0
    %139 = vmatpush1.msra.mxu0 0.0
    %140 = vmatprep.subr.mxu0 0.0
    %141 = vmatpush1.msra.mxu0 0.0
    %142 = vmatprep.subr.mxu0 0.0
    %143 = vmatpush1.msra.mxu0 0.0
    %144 = vmatprep.subr.mxu0 0.0
    %145 = vmatpush1.msra.mxu0 0.0
    %146 = vmatprep.subr.mxu0 0.0
    %147 = vmatpush1.msra.mxu0 0.0
    %148 = vmatprep.subr.mxu0 0.0
    %149 = vmatpush1.msra.mxu0 0.0
    %150 = vmatprep.subr.mxu0 0.0
    %151 = vmatpush1.msra.mxu0 0.0
    %152 = vmatprep.subr.mxu0 0.0
    %153 = vmatpush1.msra.mxu0 0.0
    %154 = vmatprep.subr.mxu0 0.0
    %155 = vmatpush1.msra.mxu0 0.0
    %156 = vmatprep.subr.mxu0 0.0
    %157 = vmatpush1.msra.mxu0 0.0
    %158 = vmatprep.subr.mxu0 0.0
    %159 = vmatpush1.msra.mxu0 0.0
    %160 = vmatprep.subr.mxu0 0.0
    %161 = vmatpush1.msra.mxu0 0.0
    %162 = vmatprep.subr.mxu0 0.0
    %163 = vmatpush1.msra.mxu0 0.0
    %164 = vmatprep.subr.mxu0 0.0
    %165 = vmatpush1.msra.mxu0 0.0
    %166 = vmatprep.subr.mxu0 0.0
    %167 = vmatpush1.msra.mxu0 0.0
    %168 = vmatprep.subr.mxu0 0.0
    %169 = vmatpush1.msra.mxu0 0.0
    %170 = vmatprep.subr.mxu0 0.0
    %171 = vmatpush1.msra.mxu0 0.0
    %172 = vmatprep.mubr.f32.mxu0 0.0
    %173 = vmatmul.mubr.f32.gmra.mrb[0].mxu0 %v102
    %v174 = vpop.f32.mrb[0].mxu0
    %v175 = vadd.f32 0.0, %v174
    %v176 = vpop.f32.mrb[0].mxu0
    %177 = vdwg.mxu0
    %v178 = vadd.f32 %v93, %v175
    %v179 = vld [vmem:[#allocation5] sm:$0xff]
    %v180 = vld [vmem:[#allocation8 + $0x8] sm:$0xff]
    %vm181 = vcmask 64512
    %v183 = vsel %vm181, %v179, 0
    %185 = vmatprep.subr.mxu0 0.0
    %186 = vmatpush1.msra.mxu0 %v180
    %187 = vmatprep.subr.mxu0 0.0
    %188 = vmatpush1.msra.mxu0 0.0
    %189 = vmatprep.subr.mxu0 0.0
    %190 = vmatpush1.msra.mxu0 0.0
    %191 = vmatprep.subr.mxu0 0.0
    %192 = vmatpush1.msra.mxu0 0.0
    %193 = vmatprep.subr.mxu0 0.0
    %194 = vmatpush1.msra.mxu0 0.0
    %195 = vmatprep.subr.mxu0 0.0
    %196 = vmatpush1.msra.mxu0 0.0
    %197 = vmatprep.subr.mxu0 0.0
    %198 = vmatpush1.msra.mxu0 0.0
    %199 = vmatprep.subr.mxu0 0.0
    %200 = vmatpush1.msra.mxu0 0.0
    %201 = vmatprep.subr.mxu0 0.0
    %202 = vmatpush1.msra.mxu0 0.0
    %203 = vmatprep.subr.mxu0 0.0
    %204 = vmatpush1.msra.mxu0 0.0
    %205 = vmatprep.subr.mxu0 0.0
    %206 = vmatpush1.msra.mxu0 0.0
    %207 = vmatprep.subr.mxu0 0.0
    %208 = vmatpush1.msra.mxu0 0.0
    %209 = vmatprep.subr.mxu0 0.0
    %210 = vmatpush1.msra.mxu0 0.0
    %211 = vmatprep.subr.mxu0 0.0
    %212 = vmatpush1.msra.mxu0 0.0
    %213 = vmatprep.subr.mxu0 0.0
    %214 = vmatpush1.msra.mxu0 0.0
    %215 = vmatprep.subr.mxu0 0.0
    %216 = vmatpush1.msra.mxu0 0.0
    %217 = vmatprep.subr.mxu0 0.0
    %218 = vmatpush1.msra.mxu0 0.0
    %219 = vmatprep.subr.mxu0 0.0
    %220 = vmatpush1.msra.mxu0 0.0
    %221 = vmatprep.subr.mxu0 0.0
    %222 = vmatpush1.msra.mxu0 0.0
    %223 = vmatprep.subr.mxu0 0.0
    %224 = vmatpush1.msra.mxu0 0.0
    %225 = vmatprep.subr.mxu0 0.0
    %226 = vmatpush1.msra.mxu0 0.0
    %227 = vmatprep.subr.mxu0 0.0
    %228 = vmatpush1.msra.mxu0 0.0
    %229 = vmatprep.subr.mxu0 0.0
    %230 = vmatpush1.msra.mxu0 0.0
    %231 = vmatprep.subr.mxu0 0.0
    %232 = vmatpush1.msra.mxu0 0.0
    %233 = vmatprep.subr.mxu0 0.0
    %234 = vmatpush1.msra.mxu0 0.0
    %235 = vmatprep.subr.mxu0 0.0
    %236 = vmatpush1.msra.mxu0 0.0
    %237 = vmatprep.subr.mxu0 0.0
    %238 = vmatpush1.msra.mxu0 0.0
    %239 = vmatprep.subr.mxu0 0.0
    %240 = vmatpush1.msra.mxu0 0.0
    %241 = vmatprep.subr.mxu0 0.0
    %242 = vmatpush1.msra.mxu0 0.0
    %243 = vmatprep.subr.mxu0 0.0
    %244 = vmatpush1.msra.mxu0 0.0
    %245 = vmatprep.subr.mxu0 0.0
    %246 = vmatpush1.msra.mxu0 0.0
    %247 = vmatprep.subr.mxu0 0.0
    %248 = vmatpush1.msra.mxu0 0.0
    %249 = vmatprep.mubr.f32.mxu0 0.0
    %250 = vmatmul.mubr.f32.gmra.mrb[0].mxu0 %v183
    %v251 = vpop.f32.mrb[0].mxu0
    %v252 = vadd.f32 0.0, %v251
    %v253 = vpop.f32.mrb[0].mxu0
    %254 = vdwg.mxu0
    %v255 = vadd.f32 %v178, %v252
    %v256 = vld [vmem:[#allocation7] sm:$0xff]
    %v257 = vld [vmem:[#allocation8 + $0x10] sm:$0xff]
    %v258 = vld [vmem:[#allocation8 + $0x18] sm:$0xff]
    %v259 = vld [vmem:[#allocation8 + $0x20] sm:$0xff]
    %vm260 = vcmask 195584
    %v262 = vsel %vm260, %v256, 0
    %264 = vmatprep.subr.mxu0 0.0
    %265 = vmatpush1.msra.mxu0 %v257
    %266 = vmatprep.subr.mxu0 0.0
    %267 = vmatpush1.msra.mxu0 %v258
    %268 = vmatprep.subr.mxu0 0.0
    %269 = vmatpush1.msra.mxu0 %v259
    %270 = vmatprep.subr.mxu0 0.0
    %271 = vmatpush1.msra.mxu0 0.0
    %272 = vmatprep.subr.mxu0 0.0
    %273 = vmatpush1.msra.mxu0 0.0
    %274 = vmatprep.subr.mxu0 0.0
    %275 = vmatpush1.msra.mxu0 0.0
    %276 = vmatprep.subr.mxu0 0.0
    %277 = vmatpush1.msra.mxu0 0.0
    %278 = vmatprep.subr.mxu0 0.0
    %279 = vmatpush1.msra.mxu0 0.0
    %280 = vmatprep.subr.mxu0 0.0
    %281 = vmatpush1.msra.mxu0 0.0
    %282 = vmatprep.subr.mxu0 0.0
    %283 = vmatpush1.msra.mxu0 0.0
    %284 = vmatprep.subr.mxu0 0.0
    %285 = vmatpush1.msra.mxu0 0.0
    %286 = vmatprep.subr.mxu0 0.0
    %287 = vmatpush1.msra.mxu0 0.0
    %288 = vmatprep.subr.mxu0 0.0
    %289 = vmatpush1.msra.mxu0 0.0
    %290 = vmatprep.subr.mxu0 0.0
    %291 = vmatpush1.msra.mxu0 0.0
    %292 = vmatprep.subr.mxu0 0.0
    %293 = vmatpush1.msra.mxu0 0.0
    %294 = vmatprep.subr.mxu0 0.0
    %295 = vmatpush1.msra.mxu0 0.0
    %296 = vmatprep.subr.mxu0 0.0
    %297 = vmatpush1.msra.mxu0 0.0
    %298 = vmatprep.subr.mxu0 0.0
    %299 = vmatpush1.msra.mxu0 0.0
    %300 = vmatprep.subr.mxu0 0.0
    %301 = vmatpush1.msra.mxu0 0.0
    %302 = vmatprep.subr.mxu0 0.0
    %303 = vmatpush1.msra.mxu0 0.0
    %304 = vmatprep.subr.mxu0 0.0
    %305 = vmatpush1.msra.mxu0 0.0
    %306 = vmatprep.subr.mxu0 0.0
    %307 = vmatpush1.msra.mxu0 0.0
    %308 = vmatprep.subr.mxu0 0.0
    %309 = vmatpush1.msra.mxu0 0.0
    %310 = vmatprep.subr.mxu0 0.0
    %311 = vmatpush1.msra.mxu0 0.0
    %312 = vmatprep.subr.mxu0 0.0
    %313 = vmatpush1.msra.mxu0 0.0
    %314 = vmatprep.subr.mxu0 0.0
    %315 = vmatpush1.msra.mxu0 0.0
    %316 = vmatprep.subr.mxu0 0.0
    %317 = vmatpush1.msra.mxu0 0.0
    %318 = vmatprep.subr.mxu0 0.0
    %319 = vmatpush1.msra.mxu0 0.0
    %320 = vmatprep.subr.mxu0 0.0
    %321 = vmatpush1.msra.mxu0 0.0
    %322 = vmatprep.subr.mxu0 0.0
    %323 = vmatpush1.msra.mxu0 0.0
    %324 = vmatprep.subr.mxu0 0.0
    %325 = vmatpush1.msra.mxu0 0.0
    %326 = vmatprep.subr.mxu0 0.0
    %327 = vmatpush1.msra.mxu0 0.0
    %328 = vmatprep.mubr.f32.mxu0 0.0
    %329 = vmatmul.mubr.f32.gmra.mrb[0].mxu0 %v262
    %v330 = vpop.f32.mrb[0].mxu0
    %v331 = vadd.f32 0.0, %v330
    %v332 = vpop.f32.mrb[0].mxu0
    %333 = vdwg.mxu0
    %v334 = vadd.f32 %v255, %v331
    %v335 = vld [vmem:[%s3] sm:$0xff]
    %v336 = vld [vmem:[#allocation8 + $0x28] sm:$0xff]
    %v337 = vld [vmem:[#allocation8 + $0x30] sm:$0x1]
    %vm338 = vcmask 72704
    %v340 = vsel %vm338, %v335, 0
    %vm342 = vcmask 1040384
    %v344 = vsel %vm342, %v337, 0
    %346 = vmatprep.subr.mxu0 0.0
    %347 = vmatpush1.msra.mxu0 %v336
    %348 = vmatprep.subr.mxu0 0.0
    %349 = vmatpush1.msra.mxu0 %v344
    %350 = vmatprep.subr.mxu0 0.0
    %351 = vmatpush1.msra.mxu0 0.0
    %352 = vmatprep.subr.mxu0 0.0
    %353 = vmatpush1.msra.mxu0 0.0
    %354 = vmatprep.subr.mxu0 0.0
    %355 = vmatpush1.msra.mxu0 0.0
    %356 = vmatprep.subr.mxu0 0.0
    %357 = vmatpush1.msra.mxu0 0.0
    %358 = vmatprep.subr.mxu0 0.0
    %359 = vmatpush1.msra.mxu0 0.0
    %360 = vmatprep.subr.mxu0 0.0
    %361 = vmatpush1.msra.mxu0 0.0
    %362 = vmatprep.subr.mxu0 0.0
    %363 = vmatpush1.msra.mxu0 0.0
    %364 = vmatprep.subr.mxu0 0.0
    %365 = vmatpush1.msra.mxu0 0.0
    %366 = vmatprep.subr.mxu0 0.0
    %367 = vmatpush1.msra.mxu0 0.0
    %368 = vmatprep.subr.mxu0 0.0
    %369 = vmatpush1.msra.mxu0 0.0
    %370 = vmatprep.subr.mxu0 0.0
    %371 = vmatpush1.msra.mxu0 0.0
    %372 = vmatprep.subr.mxu0 0.0
    %373 = vmatpush1.msra.mxu0 0.0
    %374 = vmatprep.subr.mxu0 0.0
    %375 = vmatpush1.msra.mxu0 0.0
    %376 = vmatprep.subr.mxu0 0.0
    %377 = vmatpush1.msra.mxu0 0.0
    %378 = vmatprep.subr.mxu0 0.0
    %379 = vmatpush1.msra.mxu0 0.0
    %380 = vmatprep.subr.mxu0 0.0
    %381 = vmatpush1.msra.mxu0 0.0
    %382 = vmatprep.subr.mxu0 0.0
    %383 = vmatpush1.msra.mxu0 0.0
    %384 = vmatprep.subr.mxu0 0.0
    %385 = vmatpush1.msra.mxu0 0.0
    %386 = vmatprep.subr.mxu0 0.0
    %387 = vmatpush1.msra.mxu0 0.0
    %388 = vmatprep.subr.mxu0 0.0
    %389 = vmatpush1.msra.mxu0 0.0
    %390 = vmatprep.subr.mxu0 0.0
    %391 = vmatpush1.msra.mxu0 0.0
    %392 = vmatprep.subr.mxu0 0.0
    %393 = vmatpush1.msra.mxu0 0.0
    %394 = vmatprep.subr.mxu0 0.0
    %395 = vmatpush1.msra.mxu0 0.0
    %396 = vmatprep.subr.mxu0 0.0
    %397 = vmatpush1.msra.mxu0 0.0
    %398 = vmatprep.subr.mxu0 0.0
    %399 = vmatpush1.msra.mxu0 0.0
    %400 = vmatprep.subr.mxu0 0.0
    %401 = vmatpush1.msra.mxu0 0.0
    %402 = vmatprep.subr.mxu0 0.0
    %403 = vmatpush1.msra.mxu0 0.0
    %404 = vmatprep.subr.mxu0 0.0
    %405 = vmatpush1.msra.mxu0 0.0
    %406 = vmatprep.subr.mxu0 0.0
    %407 = vmatpush1.msra.mxu0 0.0
    %408 = vmatprep.subr.mxu0 0.0
    %409 = vmatpush1.msra.mxu0 0.0
    %410 = vmatprep.mubr.f32.mxu0 0.0
    %411 = vmatmul.mubr.f32.gmra.mrb[0].mxu0 %v340
    %v412 = vpop.f32.mrb[0].mxu0
    %v413 = vadd.f32 0.0, %v412
    %v414 = vpop.f32.mrb[0].mxu0
    %415 = vdwg.mxu0
    %v416 = vadd.f32 %v334, %v413
    %v417 = vld [vmem:[#allocation10] sm:$0xff]
    %v418 = vld [vmem:[#allocation10 + $0x8] sm:$0xff]
    %v419 = vld [vmem:[#allocation10 + $0x10] sm:$0xff]
    %v420 = vld [vmem:[#allocation10 + $0x18] sm:$0xff]
    %v421 = vld [vmem:[#allocation10 + $0x20] sm:$0xff]
    %v422 = vld [vmem:[#allocation10 + $0x28] sm:$0xff]
    %v423 = vld [vmem:[#allocation10 + $0x30] sm:$0xff]
    %v424 = vld [vmem:[#allocation10 + $0x38] sm:$0xff]
    %v425 = vld [vmem:[#allocation10 + $0x40] sm:$0xff]
    %v426 = vld [vmem:[#allocation10 + $0x48] sm:$0xff]
    %v427 = vld [vmem:[#allocation10 + $0x50] sm:$0xff]
    %v428 = vld [vmem:[#allocation10 + $0x58] sm:$0xff]
    %v429 = vld [vmem:[#allocation10 + $0x60] sm:$0xff]
    %v430 = vld [vmem:[#allocation10 + $0x68] sm:$0xff]
    %v431 = vld [vmem:[#allocation10 + $0x70] sm:$0xff]
    %v432 = vld [vmem:[#allocation10 + $0x78] sm:$0xff]
    %v433 = vld [vmem:[%s6 + $0x1] sm:$0x1]
    %v434 = vlaneseq
    %v435 = vshrl.u32 %v434, 7
    %v436 = vsub.s32 0, %v435
    %v437 = vrot.slane %v433, %v436
    %438 = vmatprep.subr.mxu0 0.0
    %439 = vmatpush1.msra.mxu0 %v417
    %440 = vmatprep.subr.mxu0 0.0
    %441 = vmatpush1.msra.mxu0 %v418
    %442 = vmatprep.subr.mxu0 0.0
    %443 = vmatpush1.msra.mxu0 %v419
    %444 = vmatprep.subr.mxu0 0.0
    %445 = vmatpush1.msra.mxu0 %v420
    %446 = vmatprep.subr.mxu0 0.0
    %447 = vmatpush1.msra.mxu0 %v421
    %448 = vmatprep.subr.mxu0 0.0
    %449 = vmatpush1.msra.mxu0 %v422
    %450 = vmatprep.subr.mxu0 0.0
    %451 = vmatpush1.msra.mxu0 %v423
    %452 = vmatprep.subr.mxu0 0.0
    %453 = vmatpush1.msra.mxu0 %v424
    %454 = vmatprep.subr.mxu0 0.0
    %455 = vmatpush1.msra.mxu0 %v425
    %456 = vmatprep.subr.mxu0 0.0
    %457 = vmatpush1.msra.mxu0 %v426
    %458 = vmatprep.subr.mxu0 0.0
    %459 = vmatpush1.msra.mxu0 %v427
    %460 = vmatprep.subr.mxu0 0.0
    %461 = vmatpush1.msra.mxu0 %v428
    %462 = vmatprep.subr.mxu0 0.0
    %463 = vmatpush1.msra.mxu0 %v429
    %464 = vmatprep.subr.mxu0 0.0
    %465 = vmatpush1.msra.mxu0 %v430
    %466 = vmatprep.subr.mxu0 0.0
    %467 = vmatpush1.msra.mxu0 %v431
    %468 = vmatprep.subr.mxu0 0.0
    %469 = vmatpush1.msra.mxu0 %v432
    %470 = vmatprep.subr.mxu0 0.0
    %471 = vmatpush1.msra.mxu0 0.0
    %472 = vmatprep.subr.mxu0 0.0
    %473 = vmatpush1.msra.mxu0 0.0
    %474 = vmatprep.subr.mxu0 0.0
    %475 = vmatpush1.msra.mxu0 0.0
    %476 = vmatprep.subr.mxu0 0.0
    %477 = vmatpush1.msra.mxu0 0.0
    %478 = vmatprep.subr.mxu0 0.0
    %479 = vmatpush1.msra.mxu0 0.0
    %480 = vmatprep.subr.mxu0 0.0
    %481 = vmatpush1.msra.mxu0 0.0
    %482 = vmatprep.subr.mxu0 0.0
    %483 = vmatpush1.msra.mxu0 0.0
    %484 = vmatprep.subr.mxu0 0.0
    %485 = vmatpush1.msra.mxu0 0.0
    %486 = vmatprep.subr.mxu0 0.0
    %487 = vmatpush1.msra.mxu0 0.0
    %488 = vmatprep.subr.mxu0 0.0
    %489 = vmatpush1.msra.mxu0 0.0
    %490 = vmatprep.subr.mxu0 0.0
    %491 = vmatpush1.msra.mxu0 0.0
    %492 = vmatprep.subr.mxu0 0.0
    %493 = vmatpush1.msra.mxu0 0.0
    %494 = vmatprep.subr.mxu0 0.0
    %495 = vmatpush1.msra.mxu0 0.0
    %496 = vmatprep.subr.mxu0 0.0
    %497 = vmatpush1.msra.mxu0 0.0
    %498 = vmatprep.subr.mxu0 0.0
    %499 = vmatpush1.msra.mxu0 0.0
    %500 = vmatprep.subr.mxu0 0.0
    %501 = vmatpush1.msra.mxu0 0.0
    %502 = vmatprep.mubr.f32.mxu0 0.0
    %503 = vmatmul.mubr.f32.gmra.mrb[0].mxu0 %v416
    %v504 = vpop.f32.mrb[0].mxu0
    %v505 = vadd.f32 %v437, %v504
    %v506 = vpop.f32.mrb[0].mxu0
    %507 = vdwg.mxu0
    %v508 = vmax.f32 %v505, 0.0
    %s509 = scalar_lea.vmem [#allocation10], 128
    %v510 = vld [vmem:[%s509] sm:$0xff]
    %v511 = vld [vmem:[%s509 + $0x8] sm:$0xff]
    %v512 = vld [vmem:[%s509 + $0x10] sm:$0xff]
    %v513 = vld [vmem:[%s509 + $0x18] sm:$0xff]
    %v514 = vld [vmem:[%s509 + $0x20] sm:$0xff]
    %v515 = vld [vmem:[%s509 + $0x28] sm:$0xff]
    %v516 = vld [vmem:[%s509 + $0x30] sm:$0xff]
    %v517 = vld [vmem:[%s509 + $0x38] sm:$0xff]
    %v518 = vld [vmem:[%s509 + $0x40] sm:$0xff]
    %v519 = vld [vmem:[%s509 + $0x48] sm:$0xff]
    %v520 = vld [vmem:[%s509 + $0x50] sm:$0xff]
    %v521 = vld [vmem:[%s509 + $0x58] sm:$0xff]
    %v522 = vld [vmem:[%s509 + $0x60] sm:$0xff]
    %v523 = vld [vmem:[%s509 + $0x68] sm:$0xff]
    %v524 = vld [vmem:[%s509 + $0x70] sm:$0xff]
    %v525 = vld [vmem:[%s509 + $0x78] sm:$0xff]
    %v526 = vld [vmem:[%s6 + $0x2] sm:$0x1]
    %v527 = vlaneseq
    %v528 = vshrl.u32 %v527, 7
    %v529 = vsub.s32 0, %v528
    %v530 = vrot.slane %v526, %v529
    %531 = vmatprep.subr.mxu0 0.0
    %532 = vmatpush1.msra.mxu0 %v510
    %533 = vmatprep.subr.mxu0 0.0
    %534 = vmatpush1.msra.mxu0 %v511
    %535 = vmatprep.subr.mxu0 0.0
    %536 = vmatpush1.msra.mxu0 %v512
    %537 = vmatprep.subr.mxu0 0.0
    %538 = vmatpush1.msra.mxu0 %v513
    %539 = vmatprep.subr.mxu0 0.0
    %540 = vmatpush1.msra.mxu0 %v514
    %541 = vmatprep.subr.mxu0 0.0
    %542 = vmatpush1.msra.mxu0 %v515
    %543 = vmatprep.subr.mxu0 0.0
    %544 = vmatpush1.msra.mxu0 %v516
    %545 = vmatprep.subr.mxu0 0.0
    %546 = vmatpush1.msra.mxu0 %v517
    %547 = vmatprep.subr.mxu0 0.0
    %548 = vmatpush1.msra.mxu0 %v518
    %549 = vmatprep.subr.mxu0 0.0
    %550 = vmatpush1.msra.mxu0 %v519
    %551 = vmatprep.subr.mxu0 0.0
    %552 = vmatpush1.msra.mxu0 %v520
    %553 = vmatprep.subr.mxu0 0.0
    %554 = vmatpush1.msra.mxu0 %v521
    %555 = vmatprep.subr.mxu0 0.0
    %556 = vmatpush1.msra.mxu0 %v522
    %557 = vmatprep.subr.mxu0 0.0
    %558 = vmatpush1.msra.mxu0 %v523
    %559 = vmatprep.subr.mxu0 0.0
    %560 = vmatpush1.msra.mxu0 %v524
    %561 = vmatprep.subr.mxu0 0.0
    %562 = vmatpush1.msra.mxu0 %v525
    %563 = vmatprep.subr.mxu0 0.0
    %564 = vmatpush1.msra.mxu0 0.0
    %565 = vmatprep.subr.mxu0 0.0
    %566 = vmatpush1.msra.mxu0 0.0
    %567 = vmatprep.subr.mxu0 0.0
    %568 = vmatpush1.msra.mxu0 0.0
    %569 = vmatprep.subr.mxu0 0.0
    %570 = vmatpush1.msra.mxu0 0.0
    %571 = vmatprep.subr.mxu0 0.0
    %572 = vmatpush1.msra.mxu0 0.0
    %573 = vmatprep.subr.mxu0 0.0
    %574 = vmatpush1.msra.mxu0 0.0
    %575 = vmatprep.subr.mxu0 0.0
    %576 = vmatpush1.msra.mxu0 0.0
    %577 = vmatprep.subr.mxu0 0.0
    %578 = vmatpush1.msra.mxu0 0.0
    %579 = vmatprep.subr.mxu0 0.0
    %580 = vmatpush1.msra.mxu0 0.0
    %581 = vmatprep.subr.mxu0 0.0
    %582 = vmatpush1.msra.mxu0 0.0
    %583 = vmatprep.subr.mxu0 0.0
    %584 = vmatpush1.msra.mxu0 0.0
    %585 = vmatprep.subr.mxu0 0.0
    %586 = vmatpush1.msra.mxu0 0.0
    %587 = vmatprep.subr.mxu0 0.0
    %588 = vmatpush1.msra.mxu0 0.0
    %589 = vmatprep.subr.mxu0 0.0
    %590 = vmatpush1.msra.mxu0 0.0
    %591 = vmatprep.subr.mxu0 0.0
    %592 = vmatpush1.msra.mxu0 0.0
    %593 = vmatprep.subr.mxu0 0.0
    %594 = vmatpush1.msra.mxu0 0.0
    %595 = vmatprep.mubr.f32.mxu0 0.0
    %596 = vmatmul.mubr.f32.gmra.mrb[0].mxu0 %v508
    %v597 = vpop.f32.mrb[0].mxu0
    %v598 = vadd.f32 %v530, %v597
    %v599 = vpop.f32.mrb[0].mxu0
    %600 = vdwg.mxu0
    %v601 = vadd.f32 %v598, %v416
    %v602 = vmax.f32 %v601, 0.0
    %s603 = scalar_lea.vmem [#allocation10], 256
    %v604 = vld [vmem:[%s603] sm:$0xff]
    %v605 = vld [vmem:[%s603 + $0x8] sm:$0xff]
    %v606 = vld [vmem:[%s603 + $0x10] sm:$0xff]
    %v607 = vld [vmem:[%s603 + $0x18] sm:$0xff]
    %v608 = vld [vmem:[%s603 + $0x20] sm:$0xff]
    %v609 = vld [vmem:[%s603 + $0x28] sm:$0xff]
    %v610 = vld [vmem:[%s603 + $0x30] sm:$0xff]
    %v611 = vld [vmem:[%s603 + $0x38] sm:$0xff]
    %v612 = vld [vmem:[%s603 + $0x40] sm:$0xff]
    %v613 = vld [vmem:[%s603 + $0x48] sm:$0xff]
    %v614 = vld [vmem:[%s603 + $0x50] sm:$0xff]
    %v615 = vld [vmem:[%s603 + $0x58] sm:$0xff]
    %v616 = vld [vmem:[%s603 + $0x60] sm:$0xff]
    %v617 = vld [vmem:[%s603 + $0x68] sm:$0xff]
    %v618 = vld [vmem:[%s603 + $0x70] sm:$0xff]
    %v619 = vld [vmem:[%s603 + $0x78] sm:$0xff]
    %v620 = vld [vmem:[%s6 + $0x3] sm:$0x1]
    %v621 = vlaneseq
    %v622 = vshrl.u32 %v621, 7
    %v623 = vsub.s32 0, %v622
    %v624 = vrot.slane %v620, %v623
    %625 = vmatprep.subr.mxu0 0.0
    %626 = vmatpush1.msra.mxu0 %v604
    %627 = vmatprep.subr.mxu0 0.0
    %628 = vmatpush1.msra.mxu0 %v605
    %629 = vmatprep.subr.mxu0 0.0
    %630 = vmatpush1.msra.mxu0 %v606
    %631 = vmatprep.subr.mxu0 0.0
    %632 = vmatpush1.msra.mxu0 %v607
    %633 = vmatprep.subr.mxu0 0.0
    %634 = vmatpush1.msra.mxu0 %v608
    %635 = vmatprep.subr.mxu0 0.0
    %636 = vmatpush1.msra.mxu0 %v609
    %637 = vmatprep.subr.mxu0 0.0
    %638 = vmatpush1.msra.mxu0 %v610
    %639 = vmatprep.subr.mxu0 0.0
    %640 = vmatpush1.msra.mxu0 %v611
    %641 = vmatprep.subr.mxu0 0.0
    %642 = vmatpush1.msra.mxu0 %v612
    %643 = vmatprep.subr.mxu0 0.0
    %644 = vmatpush1.msra.mxu0 %v613
    %645 = vmatprep.subr.mxu0 0.0
    %646 = vmatpush1.msra.mxu0 %v614
    %647 = vmatprep.subr.mxu0 0.0
    %648 = vmatpush1.msra.mxu0 %v615
    %649 = vmatprep.subr.mxu0 0.0
    %650 = vmatpush1.msra.mxu0 %v616
    %651 = vmatprep.subr.mxu0 0.0
    %652 = vmatpush1.msra.mxu0 %v617
    %653 = vmatprep.subr.mxu0 0.0
    %654 = vmatpush1.msra.mxu0 %v618
    %655 = vmatprep.subr.mxu0 0.0
    %656 = vmatpush1.msra.mxu0 %v619
    %657 = vmatprep.subr.mxu0 0.0
    %658 = vmatpush1.msra.mxu0 0.0
    %659 = vmatprep.subr.mxu0 0.0
    %660 = vmatpush1.msra.mxu0 0.0
    %661 = vmatprep.subr.mxu0 0.0
    %662 = vmatpush1.msra.mxu0 0.0
    %663 = vmatprep.subr.mxu0 0.0
    %664 = vmatpush1.msra.mxu0 0.0
    %665 = vmatprep.subr.mxu0 0.0
    %666 = vmatpush1.msra.mxu0 0.0
    %667 = vmatprep.subr.mxu0 0.0
    %668 = vmatpush1.msra.mxu0 0.0
    %669 = vmatprep.subr.mxu0 0.0
    %670 = vmatpush1.msra.mxu0 0.0
    %671 = vmatprep.subr.mxu0 0.0
    %672 = vmatpush1.msra.mxu0 0.0
    %673 = vmatprep.subr.mxu0 0.0
    %674 = vmatpush1.msra.mxu0 0.0
    %675 = vmatprep.subr.mxu0 0.0
    %676 = vmatpush1.msra.mxu0 0.0
    %677 = vmatprep.subr.mxu0 0.0
    %678 = vmatpush1.msra.mxu0 0.0
    %679 = vmatprep.subr.mxu0 0.0
    %680 = vmatpush1.msra.mxu0 0.0
    %681 = vmatprep.subr.mxu0 0.0
    %682 = vmatpush1.msra.mxu0 0.0
    %683 = vmatprep.subr.mxu0 0.0
    %684 = vmatpush1.msra.mxu0 0.0
    %685 = vmatprep.subr.mxu0 0.0
    %686 = vmatpush1.msra.mxu0 0.0
    %687 = vmatprep.subr.mxu0 0.0
    %688 = vmatpush1.msra.mxu0 0.0
    %689 = vmatprep.mubr.f32.mxu0 0.0
    %690 = vmatmul.mubr.f32.gmra.mrb[0].mxu0 %v602
    %v691 = vpop.f32.mrb[0].mxu0
    %v692 = vadd.f32 %v624, %v691
    %v693 = vpop.f32.mrb[0].mxu0
    %694 = vdwg.mxu0
    %695 = vst [vmem:[#allocation11] sm:$0xff] %v692
    // Predicated region
    $region50: #{tpu_custom_call.1} parent=1 // pred_check
      _
    $region51: #{tpu_custom_call.1} parent=1 // pred_check_branch
      %697 = sbr.rel (0) target = $region53
    $region52: #{tpu_custom_call.1} parent=1 // pred_region
      %s699 = ssub.s32 128, 128
      %700 = vsyncadd [#allocation4], %s699
      %s702 = sshll.u32 [#allocation11], 4
      %s703 = int_to_ptr.vmem [resolvable:$true] %s702
      %705 = dma.vmem_to_hbm [thread:$0]  %s703, 128, %s7, [#allocation4]
    $region53: #{tpu_custom_call.1} parent=1 // pred_fallthru
      _
    // Predicated region
    $region54: #{tpu_custom_call.1} parent=1 // pred_check
      _
    $region55: #{tpu_custom_call.1} parent=1 // pred_check_branch
      %707 = sbr.rel (0) target = $region57
    $region56: #{tpu_custom_call.1} parent=1 // pred_region
      %708 = dma.done [#allocation4], 128
    $region57: #{tpu_custom_call.1} parent=1 // pred_fallthru
      _
    %709 = vsyncpa [#allocation3], 1
    %710 = vsyncpa [#allocation6], 1
    %711 = vsyncpa [#allocation9], 1
    %712 = vsyncpa [#allocation4], 1

</llo_original>
